<compile_context>
chip_gen: v7x
topology: tpu7x:2x2x1
jax: 0.10.0
libtpu: 0.0.40
codegen_flags: <defaults>
</compile_context>

<pallas_src>
import functools
import math

import jax
import jax.numpy as jnp
from jax import lax
from jax.experimental import pallas as pl
from jax.experimental.pallas import tpu as pltpu

_MIB = 1024 * 1024


# ----------------------------------------------------------------------------
# Generation-aware VMEM limit + single-buffering feature probe
# ----------------------------------------------------------------------------
def _vmem_limit(requested_bytes: int) -> int:
    """Clamp a requested scoped-VMEM limit to what the chip actually has."""
    cap = None
    try:
        cap = getattr(pltpu.get_tpu_info(), "vmem_capacity_bytes", None)
    except Exception:
        cap = None
    if not cap:
        cap = 64 * _MIB  # conservative fallback (v7x per-TensorCore VMEM)
    return int(min(max(int(requested_bytes), 16 * _MIB), int(cap * 0.85)))


_SINGLE_BUFFER_OK = None


def _single_buffer_supported() -> bool:
    """Probe whether pl.BlockSpec(..., pipeline_mode=pl.Buffered(1)) lowers."""
    global _SINGLE_BUFFER_OK
    if _SINGLE_BUFFER_OK is not None:
        return _SINGLE_BUFFER_OK
    try:
        spec = pl.BlockSpec((8, 128), lambda i: (0, 0),
                            pipeline_mode=pl.Buffered(1))

        def _probe_kernel(x_ref, o_ref):
            o_ref[...] = x_ref[...]

        x = jnp.zeros((8, 128), jnp.float32)
        jax.block_until_ready(
            pl.pallas_call(
                _probe_kernel,
                out_shape=jax.ShapeDtypeStruct((8, 128), jnp.float32),
                grid=(1,),
                in_specs=[spec],
                out_specs=pl.BlockSpec((8, 128), lambda i: (0, 0)),
            )(x))
        _SINGLE_BUFFER_OK = True
    except Exception:
        _SINGLE_BUFFER_OK = False
    return _SINGLE_BUFFER_OK


def _invariant_spec(shape, index_map):
    """BlockSpec for grid-invariant operands; single-buffered when supported."""
    if _single_buffer_supported():
        return pl.BlockSpec(shape, index_map, pipeline_mode=pl.Buffered(1))
    return pl.BlockSpec(shape, index_map)


# ----------------------------------------------------------------------------
# Kernel 1: fused QKV projection (+ bias, + query scaling, + head split)
# ----------------------------------------------------------------------------
def _qkv_proj_kernel(x_ref, wq_ref, bq_ref, wk_ref, bk_ref, wv_ref, bv_ref,
                     q_ref, k_ref, v_ref, *, n_heads, head_dim):
    inv_sqrt_d = jnp.float32(1.0 / math.sqrt(head_dim))
    x = x_ref[0]                                                  # (tm, E)

    # MXU matmuls with f32 accumulation; biases are f32.
    qf = (jnp.dot(x, wq_ref[...], preferred_element_type=jnp.float32)
          + bq_ref[0]) * inv_sqrt_d                               # scale folded in
    kf = jnp.dot(x, wk_ref[...], preferred_element_type=jnp.float32) + bk_ref[0]
    vf = jnp.dot(x, wv_ref[...], preferred_element_type=jnp.float32) + bv_ref[0]

    qf = qf.astype(q_ref.dtype)
    kf = kf.astype(k_ref.dtype)
    vf = vf.astype(v_ref.dtype)

    # Head split done ONCE here (hoisted out of the attention KV loop):
    # static lane slices written straight into the (1, H, tm, hd) output block.
    for h in range(n_heads):
        sl = slice(h * head_dim, (h + 1) * head_dim)
        q_ref[0, h] = qf[:, sl]
        k_ref[0, h] = kf[:, sl]
        v_ref[0, h] = vf[:, sl]


# ----------------------------------------------------------------------------
# Kernel 2: flash attention (online softmax, causal tile skip) + out projection
# ----------------------------------------------------------------------------
def _flash_attn_kernel(q_ref, k_ref, v_ref, wp_ref, bp_ref, o_ref,
                       m_sc, l_sc, acc_sc, *, q_tile, kv_tile, approx_recip):
    qi = pl.program_id(1)
    ki = pl.program_id(2)

    @pl.when(ki == 0)
    def _init():
        m_sc[...] = jnp.full(m_sc.shape, -jnp.inf, jnp.float32)
        l_sc[...] = jnp.zeros(l_sc.shape, jnp.float32)
        acc_sc[...] = jnp.zeros(acc_sc.shape, jnp.float32)

    # Causal tile skip: this KV tile only contributes if its first key
    # position is not past the last query position of the Q tile.
    @pl.when(ki * kv_tile < (qi + 1) * q_tile)
    def _compute():
        q3 = q_ref[0]                       # (H, tq, hd), already 1/sqrt(hd)-scaled
        k3 = k_ref[0]                       # (H, tk, hd)
        v3 = v_ref[0]                       # (H, tk, hd)
        tq = q3.shape[1]
        tk = k3.shape[1]

        # Batched QK^T over all heads (contract last dims; f32 accumulation).
        s = jnp.einsum('hmd,hnd->hmn', q3, k3,
                       preferred_element_type=jnp.float32)        # (H, tq, tk)

        # Causal mask on absolute positions.
        q_pos = qi * q_tile + lax.broadcasted_iota(jnp.int32, (tq, tk), 0)
        k_pos = ki * kv_tile + lax.broadcasted_iota(jnp.int32, (tq, tk), 1)
        s = jnp.where((k_pos <= q_pos)[None], s, jnp.float32(-jnp.inf))

        # Online softmax update (all state f32).
        m_prev = m_sc[...]                                        # (H, tq, 1)
        m_new = jnp.maximum(m_prev, s.max(axis=-1, keepdims=True))
        alpha = jnp.exp(m_prev - m_new)
        p = jnp.exp(s - m_new)
        l_sc[...] = alpha * l_sc[...] + p.sum(axis=-1, keepdims=True)
        acc_sc[...] = alpha * acc_sc[...] + jnp.einsum(
            'hmn,hnd->hmd', p.astype(v3.dtype), v3,
            preferred_element_type=jnp.float32)                   # (H, tq, hd)
        m_sc[...] = m_new

    # Finalize on the last KV step: normalize, merge heads, fused out-proj.
    @pl.when(ki == pl.num_programs(2) - 1)
    def _finalize():
        inv_l = pl.reciprocal(l_sc[...], approx=approx_recip)     # (H, tq, 1)
        o3 = acc_sc[...] * inv_l                                  # (H, tq, hd) f32
        n_heads = o3.shape[0]
        out = jnp.concatenate([o3[h] for h in range(n_heads)], axis=-1)  # (tq, E)
        out = jnp.dot(out.astype(wp_ref.dtype), wp_ref[...],
                      preferred_element_type=jnp.float32) + bp_ref[0]
        o_ref[0] = out.astype(o_ref.dtype)


# ----------------------------------------------------------------------------
# Wrapper
# ----------------------------------------------------------------------------
def attention_forward(x, params, n_heads, *, q_tile=128, kv_tile=128,
                      proj_tile=256, compute_dtype=None):
    """x: (B, T, E). params: weights (E, E) and biases (1, E).

    compute_dtype: dtype fed to the MXU (weights / matmul activations);
    accumulation and softmax stay float32. None -> x.dtype (exact f32 path).
    On v6e/v7x pass jnp.bfloat16 for ~4x MXU throughput and half the weight
    DMA bytes.
    """
    B, T, E = x.shape
    assert E % n_heads == 0
    head_dim = E // n_heads
    out_dtype = x.dtype
    out_itemsize = jnp.dtype(out_dtype).itemsize
    md = jnp.dtype(compute_dtype) if compute_dtype is not None else jnp.dtype(out_dtype)
    md_bytes = md.itemsize

    tq = min(q_tile, T)
    tk = min(kv_tile, T)
    tm = min(proj_tile, T)
    n_q = pl.cdiv(T, tq)
    n_k = pl.cdiv(T, tk)
    n_m = pl.cdiv(T, tm)

    # Cast matmul operands at the boundary; biases stay f32 (added to f32 acc).
    xc = x.astype(md)
    wq = params["wq"].astype(md)
    wk = params["wk"].astype(md)
    wv = params["wv"].astype(md)
    wp = params["wp"].astype(md)
    bq = params["bq"].astype(jnp.float32)
    bk = params["bk"].astype(jnp.float32)
    bv = params["bv"].astype(jnp.float32)
    bp = params["bp"].astype(jnp.float32)

    sb = 1 if _single_buffer_supported() else 2

    # ------------------ kernel 1: QKV projection + head split ----------------
    w2_spec = _invariant_spec((E, E), lambda b, mi: (0, 0))
    b2_spec = _invariant_spec((1, E), lambda b, mi: (0, 0))
    head_out_spec = pl.BlockSpec((1, n_heads, tm, head_dim),
                                 lambda b, mi: (b, 0, mi, 0))

    proj_cost = pl.CostEstimate(
        flops=int(6 * B * T * E * E),
        transcendentals=0,
        bytes_accessed=int(B * T * E * md_bytes + 3 * E * E * md_bytes
                           + 3 * E * 4 + 3 * B * T * E * md_bytes))
    proj_vmem = _vmem_limit(
        ((3 * E * E * md_bytes + 3 * E * 4) * sb        # weights + biases
         + 2 * tm * E * md_bytes                         # x tile (double-buffered)
         + 3 * 2 * tm * E * md_bytes                     # q/k/v out tiles
         + 4 * tm * E * 4                                # f32 intermediates
         ) * 3 // 2 + 2 * _MIB)

    q, k, v = pl.pallas_call(
        functools.partial(_qkv_proj_kernel, n_heads=n_heads, head_dim=head_dim),
        out_shape=tuple(jax.ShapeDtypeStruct((B, n_heads, T, head_dim), md)
                        for _ in range(3)),
        grid_spec=pltpu.PrefetchScalarGridSpec(
            num_scalar_prefetch=0,
            grid=(B, n_m),
            in_specs=[pl.BlockSpec((1, tm, E), lambda b, mi: (b, mi, 0)),
                      w2_spec, b2_spec,    # Wq, bq
                      w2_spec, b2_spec,    # Wk, bk
                      w2_spec, b2_spec],   # Wv, bv
            out_specs=(head_out_spec, head_out_spec, head_out_spec)),
        compiler_params=pltpu.CompilerParams(
            dimension_semantics=("parallel", "parallel"),
            vmem_limit_bytes=proj_vmem),
        cost_estimate=proj_cost,
    )(xc, wq, bq, wk, bk, wv, bv)

    # ------------------ kernel 2: flash attention + out projection -----------
    q_spec = pl.BlockSpec((1, n_heads, tq, head_dim),
                          lambda b, qi, ki: (b, 0, qi, 0))

    def _kv_index(b, qi, ki):
        # Clamp to the last causally-needed KV tile so fully-skipped tiles
        # re-use the already-resident block (no wasted DMA).
        last_needed = ((qi + 1) * tq - 1) // tk
        return (b, 0, jnp.minimum(ki, last_needed), 0)

    kv_spec = pl.BlockSpec((1, n_heads, tk, head_dim), _kv_index)
    wp_spec = _invariant_spec((E, E), lambda b, qi, ki: (0, 0))
    bp_spec = _invariant_spec((1, E), lambda b, qi, ki: (0, 0))
    out_spec = pl.BlockSpec((1, tq, E), lambda b, qi, ki: (b, qi, 0))

    attn_cost = pl.CostEstimate(
        flops=int(B * (2 * T * T * E + 2 * T * E * E)),   # causal QK^T+PV + out-proj
        transcendentals=int(B * n_heads * T * T // 2),
        bytes_accessed=int(3 * B * T * E * md_bytes + E * E * md_bytes
                           + E * 4 + B * T * E * out_itemsize))
    attn_vmem = _vmem_limit(
        ((E * E * md_bytes + E * 4) * sb                  # wp + bp
         + 2 * tq * E * md_bytes                           # q tile
         + 2 * 2 * tk * E * md_bytes                       # k, v tiles
         + 2 * tq * E * out_itemsize                       # out tile
         + n_heads * tq * (2 * 128 + head_dim) * 4         # m/l (lane-padded) + acc
         + 3 * n_heads * tq * tk * 4                       # score intermediates
         ) * 3 // 2 + 2 * _MIB)

    kernel = functools.partial(
        _flash_attn_kernel, q_tile=tq, kv_tile=tk,
        approx_recip=(md != jnp.dtype(jnp.float32)))

    return pl.pallas_call(
        kernel,
        out_shape=jax.ShapeDtypeStruct((B, T, E), out_dtype),
        grid_spec=pltpu.PrefetchScalarGridSpec(
            num_scalar_prefetch=0,
            grid=(B, n_q, n_k),
            in_specs=[q_spec, kv_spec, kv_spec, wp_spec, bp_spec],
            out_specs=out_spec,
            scratch_shapes=[pltpu.VMEM((n_heads, tq, 1), jnp.float32),   # m
                            pltpu.VMEM((n_heads, tq, 1), jnp.float32),   # l
                            pltpu.VMEM((n_heads, tq, head_dim), jnp.float32)]),
        compiler_params=pltpu.CompilerParams(
            dimension_semantics=("parallel", "parallel", "arbitrary"),
            vmem_limit_bytes=attn_vmem),
        cost_estimate=attn_cost,
    )(q, k, v, wp, bp)


# ----------------------------------------------------------------------------
# Pure-JAX reference mirroring the PyTorch forward (eval, no cache, no flash)
# ----------------------------------------------------------------------------
def reference_forward(x, params, n_heads):
    B, T, E = x.shape
    hd = E // n_heads
    q = x @ params["wq"] + params["bq"][0]
    k = x @ params["wk"] + params["bk"][0]
    v = x @ params["wv"] + params["bv"][0]
    q = q.reshape(B, T, n_heads, hd)
    k = k.reshape(B, T, n_heads, hd)
    v = v.reshape(B, T, n_heads, hd)
    att = jnp.einsum("bmhd,bnhd->bmnh", q, k)
    mask = jnp.tril(jnp.ones((T, T), dtype=bool))[None, :, :, None]
    att = jnp.where(mask, att, -jnp.inf)
    att = jax.nn.softmax(att / math.sqrt(hd), axis=2)
    out = jnp.einsum("bmnh,bnhd->bmhd", att, v)
    out = out.reshape(B, T, E)
    return out @ params["wp"] + params["bp"][0]


if __name__ == "__main__":
    # Small config consistent with the module: block_size >= seq, E % H == 0.
    B, T, E, H = 2, 8, 32, 4

    key = jax.random.PRNGKey(0)
    keys = jax.random.split(key, 9)
    scale = 1.0 / math.sqrt(E)
    params = {
        "wq": jax.random.uniform(keys[0], (E, E), jnp.float32, -scale, scale),
        "bq": jax.random.uniform(keys[1], (1, E), jnp.float32, -scale, scale),
        "wk": jax.random.uniform(keys[2], (E, E), jnp.float32, -scale, scale),
        "bk": jax.random.uniform(keys[3], (1, E), jnp.float32, -scale, scale),
        "wv": jax.random.uniform(keys[4], (E, E), jnp.float32, -scale, scale),
        "bv": jax.random.uniform(keys[5], (1, E), jnp.float32, -scale, scale),
        "wp": jax.random.uniform(keys[6], (E, E), jnp.float32, -scale, scale),
        "bp": jax.random.uniform(keys[7], (1, E), jnp.float32, -scale, scale),
    }
    x = jax.random.normal(keys[8], (B, T, E), jnp.float32)
    ref = reference_forward(x, params, H)

    # Exact f32 path (single KV tile).
    out = jax.block_until_ready(attention_forward(x, params, n_heads=H))
    assert out.shape == (B, T, E)
    assert jnp.allclose(out, ref, atol=1e-4, rtol=1e-4), "f32 mismatch vs reference"

    # bf16 MXU path (f32 accumulation / softmax) -- looser tolerance.
    out_bf16 = jax.block_until_ready(
        attention_forward(x, params, n_heads=H, compute_dtype=jnp.bfloat16))
    assert jnp.allclose(out_bf16.astype(jnp.float32), ref, atol=5e-2, rtol=5e-2), \
        "bf16 mismatch vs reference"

    # Multi-tile path: grid (B, 4, 4) exercises online softmax across KV tiles,
    # causal tile skipping, the clamped KV index_map and multi-tile projection.
    T2 = 32
    x2 = jax.random.normal(jax.random.PRNGKey(1), (B, T2, E), jnp.float32)
    out2 = jax.block_until_ready(
        attention_forward(x2, params, n_heads=H, q_tile=8, kv_tile=8, proj_tile=16))
    ref2 = reference_forward(x2, params, H)
    assert out2.shape == (B, T2, E)
    assert jnp.allclose(out2, ref2, atol=1e-4, rtol=1e-4), "tiled mismatch vs reference"

    print("KERNEL_OK")
</pallas_src>

<mosaic_0001>
module attributes {stable_mosaic.version = 11 : i64} {
  func.func @_probe_kernel(%arg0: i32, %arg1: memref<8x128xf32, #tpu.memory_space<vmem>>, %arg2: memref<8x128xf32, #tpu.memory_space<vmem>>) attributes {dimension_semantics = [#tpu.dimension_semantics<arbitrary>], iteration_bounds = array<i64: 1>, scalar_prefetch = 0 : i64, scratch_operands = 0 : i64, tpu.core_type = #tpu.core_type<tc>, window_params = [{pipeline_mode = #tpu.pipeline_mode<synchronous>, transform_indices = @transform_0, window_bounds = array<i64: 8, 128>}, {pipeline_mode = #tpu.pipeline_mode<synchronous>, transform_indices = @transform_1, window_bounds = array<i64: 8, 128>}]} {
    %c0 = arith.constant 0 : index
    %c0_0 = arith.constant 0 : index
    %0 = vector.load %arg1[%c0, %c0_0] : memref<8x128xf32, #tpu.memory_space<vmem>>, vector<8x128xf32>
    %c0_1 = arith.constant 0 : index
    %c0_2 = arith.constant 0 : index
    %1 = vector.load %arg2[%c0_1, %c0_2] : memref<8x128xf32, #tpu.memory_space<vmem>>, vector<8x128xf32>
    tpu.vector_store %arg2[%c0_1, %c0_2], %0 {strides = array<i32>} : memref<8x128xf32, #tpu.memory_space<vmem>>, vector<8x128xf32>,
    return
  }
  func.func @transform_0(%arg0: i32) -> (i32, i32) {
    %c0_i32 = arith.constant 0 : i32
    %c0_i32_0 = arith.constant 0 : i32
    %c0_i32_1 = arith.constant 0 : i32
    return %c0_i32, %c0_i32_0 : i32, i32
  }
  func.func @transform_1(%arg0: i32) -> (i32, i32) {
    %c0_i32 = arith.constant 0 : i32
    %c0_i32_0 = arith.constant 0 : i32
    %c0_i32_1 = arith.constant 0 : i32
    return %c0_i32, %c0_i32_0 : i32, i32
  }
}

module attributes {stable_mosaic.version = 11 : i64} {
  func.func @_qkv_proj_kernel(%arg0: i32, %arg1: i32, %arg2: memref<1x8x32xf32, #tpu.memory_space<vmem>>, %arg3: memref<32x32xf32, #tpu.memory_space<vmem>>, %arg4: memref<1x32xf32, #tpu.memory_space<vmem>>, %arg5: memref<32x32xf32, #tpu.memory_space<vmem>>, %arg6: memref<1x32xf32, #tpu.memory_space<vmem>>, %arg7: memref<32x32xf32, #tpu.memory_space<vmem>>, %arg8: memref<1x32xf32, #tpu.memory_space<vmem>>, %arg9: memref<1x4x8x8xf32, #tpu.memory_space<vmem>>, %arg10: memref<1x4x8x8xf32, #tpu.memory_space<vmem>>, %arg11: memref<1x4x8x8xf32, #tpu.memory_space<vmem>>) attributes {dimension_semantics = [#tpu.dimension_semantics<parallel>, #tpu.dimension_semantics<parallel>], iteration_bounds = array<i64: 2, 1>, scalar_prefetch = 0 : i64, scratch_operands = 0 : i64, tpu.core_type = #tpu.core_type<tc>, window_params = [{transform_indices = @transform_0, window_bounds = array<i64: 1, 8, 32>}, {pipeline_mode = #tpu.pipeline_mode<synchronous>, transform_indices = @transform_1, window_bounds = array<i64: 32, 32>}, {pipeline_mode = #tpu.pipeline_mode<synchronous>, transform_indices = @transform_2, window_bounds = array<i64: 1, 32>}, {pipeline_mode = #tpu.pipeline_mode<synchronous>, transform_indices = @transform_3, window_bounds = array<i64: 32, 32>}, {pipeline_mode = #tpu.pipeline_mode<synchronous>, transform_indices = @transform_4, window_bounds = array<i64: 1, 32>}, {pipeline_mode = #tpu.pipeline_mode<synchronous>, transform_indices = @transform_5, window_bounds = array<i64: 32, 32>}, {pipeline_mode = #tpu.pipeline_mode<synchronous>, transform_indices = @transform_6, window_bounds = array<i64: 1, 32>}, {transform_indices = @transform_7, window_bounds = array<i64: 1, 4, 8, 8>}, {transform_indices = @transform_8, window_bounds = array<i64: 1, 4, 8, 8>}, {transform_indices = @transform_9, window_bounds = array<i64: 1, 4, 8, 8>}]} {
    %c0 = arith.constant 0 : index
    %c0_0 = arith.constant 0 : index
    %c0_1 = arith.constant 0 : index
    %0 = vector.load %arg2[%c0, %c0_0, %c0_1] : memref<1x8x32xf32, #tpu.memory_space<vmem>>, vector<1x8x32xf32>
    %1 = vector.shape_cast %0 : vector<1x8x32xf32> to vector<8x32xf32>
    %c0_2 = arith.constant 0 : index
    %c0_3 = arith.constant 0 : index
    %2 = vector.load %arg3[%c0_2, %c0_3] : memref<32x32xf32, #tpu.memory_space<vmem>>, vector<32x32xf32>
    %cst = arith.constant dense<0.000000e+00> : vector<8x32xf32>
    %3 = tpu.matmul %1, %2, %cst {dimension_numbers = #tpu.dot_dimension_numbers<[1], [0], [0], [1], [0, 0, 1, 1], [], []>} : vector<8x32xf32>, vector<32x32xf32>, vector<8x32xf32> -> vector<8x32xf32>
    %c0_4 = arith.constant 0 : index
    %c0_5 = arith.constant 0 : index
    %4 = vector.load %arg4[%c0_4, %c0_5] : memref<1x32xf32, #tpu.memory_space<vmem>>, vector<1x32xf32>
    %5 = vector.shape_cast %4 : vector<1x32xf32> to vector<32xf32>
    %6 = vector.shape_cast %5 : vector<32xf32> to vector<1x32xf32>
    %7 = vector.broadcast %6 : vector<1x32xf32> to vector<8x32xf32>
    %8 = arith.addf %3, %7 : vector<8x32xf32>
    %cst_6 = arith.constant 0.353553385 : f32
    %9 = vector.broadcast %cst_6 : f32 to vector<8x32xf32>
    %10 = arith.mulf %8, %9 : vector<8x32xf32>
    %c0_7 = arith.constant 0 : index
    %c0_8 = arith.constant 0 : index
    %11 = vector.load %arg5[%c0_7, %c0_8] : memref<32x32xf32, #tpu.memory_space<vmem>>, vector<32x32xf32>
    %cst_9 = arith.constant dense<0.000000e+00> : vector<8x32xf32>
    %12 = tpu.matmul %1, %11, %cst_9 {dimension_numbers = #tpu.dot_dimension_numbers<[1], [0], [0], [1], [0, 0, 1, 1], [], []>} : vector<8x32xf32>, vector<32x32xf32>, vector<8x32xf32> -> vector<8x32xf32>
    %c0_10 = arith.constant 0 : index
    %c0_11 = arith.constant 0 : index
    %13 = vector.load %arg6[%c0_10, %c0_11] : memref<1x32xf32, #tpu.memory_space<vmem>>, vector<1x32xf32>
    %14 = vector.shape_cast %13 : vector<1x32xf32> to vector<32xf32>
    %15 = vector.shape_cast %14 : vector<32xf32> to vector<1x32xf32>
    %16 = vector.broadcast %15 : vector<1x32xf32> to vector<8x32xf32>
    %17 = arith.addf %12, %16 : vector<8x32xf32>
    %c0_12 = arith.constant 0 : index
    %c0_13 = arith.constant 0 : index
    %18 = vector.load %arg7[%c0_12, %c0_13] : memref<32x32xf32, #tpu.memory_space<vmem>>, vector<32x32xf32>
    %cst_14 = arith.constant dense<0.000000e+00> : vector<8x32xf32>
    %19 = tpu.matmul %1, %18, %cst_14 {dimension_numbers = #tpu.dot_dimension_numbers<[1], [0], [0], [1], [0, 0, 1, 1], [], []>} : vector<8x32xf32>, vector<32x32xf32>, vector<8x32xf32> -> vector<8x32xf32>
    %c0_15 = arith.constant 0 : index
    %c0_16 = arith.constant 0 : index
    %20 = vector.load %arg8[%c0_15, %c0_16] : memref<1x32xf32, #tpu.memory_space<vmem>>, vector<1x32xf32>
    %21 = vector.shape_cast %20 : vector<1x32xf32> to vector<32xf32>
    %22 = vector.shape_cast %21 : vector<32xf32> to vector<1x32xf32>
    %23 = vector.broadcast %22 : vector<1x32xf32> to vector<8x32xf32>
    %24 = arith.addf %19, %23 : vector<8x32xf32>
    %25 = vector.extract_strided_slice %10 {offsets = [0, 0], sizes = [8, 8], strides = [1, 1]} : vector<8x32xf32> to vector<8x8xf32>
    %c0_17 = arith.constant 0 : index
    %c0_18 = arith.constant 0 : index
    %c0_19 = arith.constant 0 : index
    %c0_20 = arith.constant 0 : index
    %26 = vector.load %arg9[%c0_17, %c0_18, %c0_19, %c0_20] : memref<1x4x8x8xf32, #tpu.memory_space<vmem>>, vector<1x1x8x8xf32>
    %27 = vector.shape_cast %26 : vector<1x1x8x8xf32> to vector<8x8xf32>
    %28 = vector.shape_cast %25 : vector<8x8xf32> to vector<1x1x8x8xf32>
    tpu.vector_store %arg9[%c0_17, %c0_18, %c0_19, %c0_20], %28 {strides = array<i32>} : memref<1x4x8x8xf32, #tpu.memory_space<vmem>>, vector<1x1x8x8xf32>,
    %29 = vector.extract_strided_slice %17 {offsets = [0, 0], sizes = [8, 8], strides = [1, 1]} : vector<8x32xf32> to vector<8x8xf32>
    %c0_21 = arith.constant 0 : index
    %c0_22 = arith.constant 0 : index
    %c0_23 = arith.constant 0 : index
    %c0_24 = arith.constant 0 : index
    %30 = vector.load %arg10[%c0_21, %c0_22, %c0_23, %c0_24] : memref<1x4x8x8xf32, #tpu.memory_space<vmem>>, vector<1x1x8x8xf32>
    %31 = vector.shape_cast %30 : vector<1x1x8x8xf32> to vector<8x8xf32>
    %32 = vector.shape_cast %29 : vector<8x8xf32> to vector<1x1x8x8xf32>
    tpu.vector_store %arg10[%c0_21, %c0_22, %c0_23, %c0_24], %32 {strides = array<i32>} : memref<1x4x8x8xf32, #tpu.memory_space<vmem>>, vector<1x1x8x8xf32>,
    %33 = vector.extract_strided_slice %24 {offsets = [0, 0], sizes = [8, 8], strides = [1, 1]} : vector<8x32xf32> to vector<8x8xf32>
    %c0_25 = arith.constant 0 : index
    %c0_26 = arith.constant 0 : index
    %c0_27 = arith.constant 0 : index
    %c0_28 = arith.constant 0 : index
    %34 = vector.load %arg11[%c0_25, %c0_26, %c0_27, %c0_28] : memref<1x4x8x8xf32, #tpu.memory_space<vmem>>, vector<1x1x8x8xf32>
    %35 = vector.shape_cast %34 : vector<1x1x8x8xf32> to vector<8x8xf32>
    %36 = vector.shape_cast %33 : vector<8x8xf32> to vector<1x1x8x8xf32>
    tpu.vector_store %arg11[%c0_25, %c0_26, %c0_27, %c0_28], %36 {strides = array<i32>} : memref<1x4x8x8xf32, #tpu.memory_space<vmem>>, vector<1x1x8x8xf32>,
    %37 = vector.extract_strided_slice %10 {offsets = [0, 8], sizes = [8, 8], strides = [1, 1]} : vector<8x32xf32> to vector<8x8xf32>
    %c0_29 = arith.constant 0 : index
    %c1 = arith.constant 1 : index
    %c0_30 = arith.constant 0 : index
    %c0_31 = arith.constant 0 : index
    %38 = vector.load %arg9[%c0_29, %c1, %c0_30, %c0_31] : memref<1x4x8x8xf32, #tpu.memory_space<vmem>>, vector<1x1x8x8xf32>
    %39 = vector.shape_cast %38 : vector<1x1x8x8xf32> to vector<8x8xf32>
    %40 = vector.shape_cast %37 : vector<8x8xf32> to vector<1x1x8x8xf32>
    tpu.vector_store %arg9[%c0_29, %c1, %c0_30, %c0_31], %40 {strides = array<i32>} : memref<1x4x8x8xf32, #tpu.memory_space<vmem>>, vector<1x1x8x8xf32>,
    %41 = vector.extract_strided_slice %17 {offsets = [0, 8], sizes = [8, 8], strides = [1, 1]} : vector<8x32xf32> to vector<8x8xf32>
    %c0_32 = arith.constant 0 : index
    %c1_33 = arith.constant 1 : index
    %c0_34 = arith.constant 0 : index
    %c0_35 = arith.constant 0 : index
    %42 = vector.load %arg10[%c0_32, %c1_33, %c0_34, %c0_35] : memref<1x4x8x8xf32, #tpu.memory_space<vmem>>, vector<1x1x8x8xf32>
    %43 = vector.shape_cast %42 : vector<1x1x8x8xf32> to vector<8x8xf32>
    %44 = vector.shape_cast %41 : vector<8x8xf32> to vector<1x1x8x8xf32>
    tpu.vector_store %arg10[%c0_32, %c1_33, %c0_34, %c0_35], %44 {strides = array<i32>} : memref<1x4x8x8xf32, #tpu.memory_space<vmem>>, vector<1x1x8x8xf32>,
    %45 = vector.extract_strided_slice %24 {offsets = [0, 8], sizes = [8, 8], strides = [1, 1]} : vector<8x32xf32> to vector<8x8xf32>
    %c0_36 = arith.constant 0 : index
    %c1_37 = arith.constant 1 : index
    %c0_38 = arith.constant 0 : index
    %c0_39 = arith.constant 0 : index
    %46 = vector.load %arg11[%c0_36, %c1_37, %c0_38, %c0_39] : memref<1x4x8x8xf32, #tpu.memory_space<vmem>>, vector<1x1x8x8xf32>
    %47 = vector.shape_cast %46 : vector<1x1x8x8xf32> to vector<8x8xf32>
    %48 = vector.shape_cast %45 : vector<8x8xf32> to vector<1x1x8x8xf32>
    tpu.vector_store %arg11[%c0_36, %c1_37, %c0_38, %c0_39], %48 {strides = array<i32>} : memref<1x4x8x8xf32, #tpu.memory_space<vmem>>, vector<1x1x8x8xf32>,
    %49 = vector.extract_strided_slice %10 {offsets = [0, 16], sizes = [8, 8], strides = [1, 1]} : vector<8x32xf32> to vector<8x8xf32>
    %c0_40 = arith.constant 0 : index
    %c2 = arith.constant 2 : index
    %c0_41 = arith.constant 0 : index
    %c0_42 = arith.constant 0 : index
    %50 = vector.load %arg9[%c0_40, %c2, %c0_41, %c0_42] : memref<1x4x8x8xf32, #tpu.memory_space<vmem>>, vector<1x1x8x8xf32>
    %51 = vector.shape_cast %50 : vector<1x1x8x8xf32> to vector<8x8xf32>
    %52 = vector.shape_cast %49 : vector<8x8xf32> to vector<1x1x8x8xf32>
    tpu.vector_store %arg9[%c0_40, %c2, %c0_41, %c0_42], %52 {strides = array<i32>} : memref<1x4x8x8xf32, #tpu.memory_space<vmem>>, vector<1x1x8x8xf32>,
    %53 = vector.extract_strided_slice %17 {offsets = [0, 16], sizes = [8, 8], strides = [1, 1]} : vector<8x32xf32> to vector<8x8xf32>
    %c0_43 = arith.constant 0 : index
    %c2_44 = arith.constant 2 : index
    %c0_45 = arith.constant 0 : index
    %c0_46 = arith.constant 0 : index
    %54 = vector.load %arg10[%c0_43, %c2_44, %c0_45, %c0_46] : memref<1x4x8x8xf32, #tpu.memory_space<vmem>>, vector<1x1x8x8xf32>
    %55 = vector.shape_cast %54 : vector<1x1x8x8xf32> to vector<8x8xf32>
    %56 = vector.shape_cast %53 : vector<8x8xf32> to vector<1x1x8x8xf32>
    tpu.vector_store %arg10[%c0_43, %c2_44, %c0_45, %c0_46], %56 {strides = array<i32>} : memref<1x4x8x8xf32, #tpu.memory_space<vmem>>, vector<1x1x8x8xf32>,
    %57 = vector.extract_strided_slice %24 {offsets = [0, 16], sizes = [8, 8], strides = [1, 1]} : vector<8x32xf32> to vector<8x8xf32>
    %c0_47 = arith.constant 0 : index
    %c2_48 = arith.constant 2 : index
    %c0_49 = arith.constant 0 : index
    %c0_50 = arith.constant 0 : index
    %58 = vector.load %arg11[%c0_47, %c2_48, %c0_49, %c0_50] : memref<1x4x8x8xf32, #tpu.memory_space<vmem>>, vector<1x1x8x8xf32>
    %59 = vector.shape_cast %58 : vector<1x1x8x8xf32> to vector<8x8xf32>
    %60 = vector.shape_cast %57 : vector<8x8xf32> to vector<1x1x8x8xf32>
    tpu.vector_store %arg11[%c0_47, %c2_48, %c0_49, %c0_50], %60 {strides = array<i32>} : memref<1x4x8x8xf32, #tpu.memory_space<vmem>>, vector<1x1x8x8xf32>,
    %61 = vector.extract_strided_slice %10 {offsets = [0, 24], sizes = [8, 8], strides = [1, 1]} : vector<8x32xf32> to vector<8x8xf32>
    %c0_51 = arith.constant 0 : index
    %c3 = arith.constant 3 : index
    %c0_52 = arith.constant 0 : index
    %c0_53 = arith.constant 0 : index
    %62 = vector.load %arg9[%c0_51, %c3, %c0_52, %c0_53] : memref<1x4x8x8xf32, #tpu.memory_space<vmem>>, vector<1x1x8x8xf32>
    %63 = vector.shape_cast %62 : vector<1x1x8x8xf32> to vector<8x8xf32>
    %64 = vector.shape_cast %61 : vector<8x8xf32> to vector<1x1x8x8xf32>
    tpu.vector_store %arg9[%c0_51, %c3, %c0_52, %c0_53], %64 {strides = array<i32>} : memref<1x4x8x8xf32, #tpu.memory_space<vmem>>, vector<1x1x8x8xf32>,
    %65 = vector.extract_strided_slice %17 {offsets = [0, 24], sizes = [8, 8], strides = [1, 1]} : vector<8x32xf32> to vector<8x8xf32>
    %c0_54 = arith.constant 0 : index
    %c3_55 = arith.constant 3 : index
    %c0_56 = arith.constant 0 : index
    %c0_57 = arith.constant 0 : index
    %66 = vector.load %arg10[%c0_54, %c3_55, %c0_56, %c0_57] : memref<1x4x8x8xf32, #tpu.memory_space<vmem>>, vector<1x1x8x8xf32>
    %67 = vector.shape_cast %66 : vector<1x1x8x8xf32> to vector<8x8xf32>
    %68 = vector.shape_cast %65 : vector<8x8xf32> to vector<1x1x8x8xf32>
    tpu.vector_store %arg10[%c0_54, %c3_55, %c0_56, %c0_57], %68 {strides = array<i32>} : memref<1x4x8x8xf32, #tpu.memory_space<vmem>>, vector<1x1x8x8xf32>,
    %69 = vector.extract_strided_slice %24 {offsets = [0, 24], sizes = [8, 8], strides = [1, 1]} : vector<8x32xf32> to vector<8x8xf32>
    %c0_58 = arith.constant 0 : index
    %c3_59 = arith.constant 3 : index
    %c0_60 = arith.constant 0 : index
    %c0_61 = arith.constant 0 : index
    %70 = vector.load %arg11[%c0_58, %c3_59, %c0_60, %c0_61] : memref<1x4x8x8xf32, #tpu.memory_space<vmem>>, vector<1x1x8x8xf32>
    %71 = vector.shape_cast %70 : vector<1x1x8x8xf32> to vector<8x8xf32>
    %72 = vector.shape_cast %69 : vector<8x8xf32> to vector<1x1x8x8xf32>
    tpu.vector_store %arg11[%c0_58, %c3_59, %c0_60, %c0_61], %72 {strides = array<i32>} : memref<1x4x8x8xf32, #tpu.memory_space<vmem>>, vector<1x1x8x8xf32>,
    return
  }
  func.func @transform_0(%arg0: i32, %arg1: i32) -> (i32, i32, i32) {
    %c0_i32 = arith.constant 0 : i32
    %c0_i32_0 = arith.constant 0 : i32
    return %arg0, %arg1, %c0_i32 : i32, i32, i32
  }
  func.func @transform_1(%arg0: i32, %arg1: i32) -> (i32, i32) {
    %c0_i32 = arith.constant 0 : i32
    %c0_i32_0 = arith.constant 0 : i32
    %c0_i32_1 = arith.constant 0 : i32
    return %c0_i32, %c0_i32_0 : i32, i32
  }
  func.func @transform_2(%arg0: i32, %arg1: i32) -> (i32, i32) {
    %c0_i32 = arith.constant 0 : i32
    %c0_i32_0 = arith.constant 0 : i32
    %c0_i32_1 = arith.constant 0 : i32
    return %c0_i32, %c0_i32_0 : i32, i32
  }
  func.func @transform_3(%arg0: i32, %arg1: i32) -> (i32, i32) {
    %c0_i32 = arith.constant 0 : i32
    %c0_i32_0 = arith.constant 0 : i32
    %c0_i32_1 = arith.constant 0 : i32
    return %c0_i32, %c0_i32_0 : i32, i32
  }
  func.func @transform_4(%arg0: i32, %arg1: i32) -> (i32, i32) {
    %c0_i32 = arith.constant 0 : i32
    %c0_i32_0 = arith.constant 0 : i32
    %c0_i32_1 = arith.constant 0 : i32
    return %c0_i32, %c0_i32_0 : i32, i32
  }
  func.func @transform_5(%arg0: i32, %arg1: i32) -> (i32, i32) {
    %c0_i32 = arith.constant 0 : i32
    %c0_i32_0 = arith.constant 0 : i32
    %c0_i32_1 = arith.constant 0 : i32
    return %c0_i32, %c0_i32_0 : i32, i32
  }
  func.func @transform_6(%arg0: i32, %arg1: i32) -> (i32, i32) {
    %c0_i32 = arith.constant 0 : i32
    %c0_i32_0 = arith.constant 0 : i32
    %c0_i32_1 = arith.constant 0 : i32
    return %c0_i32, %c0_i32_0 : i32, i32
  }
  func.func @transform_7(%arg0: i32, %arg1: i32) -> (i32, i32, i32, i32) {
    %c0_i32 = arith.constant 0 : i32
    %c0_i32_0 = arith.constant 0 : i32
    %c0_i32_1 = arith.constant 0 : i32
    return %arg0, %c0_i32, %arg1, %c0_i32_0 : i32, i32, i32, i32
  }
  func.func @transform_8(%arg0: i32, %arg1: i32) -> (i32, i32, i32, i32) {
    %c0_i32 = arith.constant 0 : i32
    %c0_i32_0 = arith.constant 0 : i32
    %c0_i32_1 = arith.constant 0 : i32
    return %arg0, %c0_i32, %arg1, %c0_i32_0 : i32, i32, i32, i32
  }
  func.func @transform_9(%arg0: i32, %arg1: i32) -> (i32, i32, i32, i32) {
    %c0_i32 = arith.constant 0 : i32
    %c0_i32_0 = arith.constant 0 : i32
    %c0_i32_1 = arith.constant 0 : i32
    return %arg0, %c0_i32, %arg1, %c0_i32_0 : i32, i32, i32, i32
  }
}

</mosaic_0001>

<llo_original>
// kernel: tpu_custom_call.1
$region0: #{tpu_custom_call.1}
  #allocation0 [shape = 'u32[]', space=smem, size = 0x4, offset = 0x4, fixed_abs, tag = 'smem constant byte address 0x4 - core index']
  #allocation1 [shape = 'u32[144,128]{1,0:T(1,128)}', space=vmem, size = 0x12000, scoped, tag = 'internal scratch']
  %s0 = inlined_call_operand.hbm [shape: f32[8,128], index: 0, kind: input, shape index: {}]
  %s1 = inlined_call_operand.hbm [shape: f32[8,128], index: 1, kind: output, shape index: {}]
  %s2 = sld [smem:[#allocation0]]
  $region18: #{tpu_custom_call.1} parent=0
    _
  %s4 = ssub.s32 1, %s2
  %s5 = scalar_select 0, %s4, %s2
  $region1: #{tpu_custom_call.1} parent=0
    #allocation2 [shape = 'u8[4096]{0}', space=vmem, size = 0x1000, scoped, tag = 'input window, operand 0, single buffered']
    #allocation3 [shape = 's32[1]{0}', space=sflag, size = 0x4, scoped, tag = 'scoped memory for tpu_custom_call.1']
    #allocation4 [shape = 's32[1]{0}', space=sflag, size = 0x4, scoped, tag = 'scoped memory for tpu_custom_call.1']
    #allocation5 [shape = 'u8[4096]{0}', space=vmem, size = 0x1000, scoped, tag = 'output window, operand 0, single buffered']
    %6 = vsyncpa [#allocation3], 0
    %7 = vsyncpa [#allocation4], 0
    // Predicated region
    $region2: #{tpu_custom_call.1} parent=1 // pred_check
      _
    $region3: #{tpu_custom_call.1} parent=1 // pred_check_branch
      %9 = sbr.rel (0) target = $region5
    $region4: #{tpu_custom_call.1} parent=1 // pred_region
      %s11 = ssub.s32 128, 128
      %12 = vsyncadd [#allocation3], %s11
      %s14 = sshll.u32 [#allocation2], 4
      %s15 = int_to_ptr.vmem [resolvable:$true] %s14
      %17 = dma.hbm_to_vmem [thread:$0]  %s0, 128, %s15, [#allocation3]
    $region5: #{tpu_custom_call.1} parent=1 // pred_fallthru
      _
    // Predicated region
    $region6: #{tpu_custom_call.1} parent=1 // pred_check
      _
    $region7: #{tpu_custom_call.1} parent=1 // pred_check_branch
      %19 = sbr.rel (0) target = $region9
    $region8: #{tpu_custom_call.1} parent=1 // pred_region
      %20 = dma.done [#allocation3], 128
    $region9: #{tpu_custom_call.1} parent=1 // pred_fallthru
      _
    %v21 = vld [vmem:[#allocation2] sm:$0xff]
    %22 = vst [vmem:[#allocation5] sm:$0xff] %v21
    // Predicated region
    $region10: #{tpu_custom_call.1} parent=1 // pred_check
      _
    $region11: #{tpu_custom_call.1} parent=1 // pred_check_branch
      %24 = sbr.rel (0) target = $region13
    $region12: #{tpu_custom_call.1} parent=1 // pred_region
      %s26 = ssub.s32 128, 128
      %27 = vsyncadd [#allocation4], %s26
      %s29 = sshll.u32 [#allocation5], 4
      %s30 = int_to_ptr.vmem [resolvable:$true] %s29
      %32 = dma.vmem_to_hbm [thread:$0]  %s30, 128, %s1, [#allocation4]
    $region13: #{tpu_custom_call.1} parent=1 // pred_fallthru
      _
    // Predicated region
    $region14: #{tpu_custom_call.1} parent=1 // pred_check
      _
    $region15: #{tpu_custom_call.1} parent=1 // pred_check_branch
      %34 = sbr.rel (0) target = $region17
    $region16: #{tpu_custom_call.1} parent=1 // pred_region
      %35 = dma.done [#allocation4], 128
    $region17: #{tpu_custom_call.1} parent=1 // pred_fallthru
      _
    %36 = vsyncpa [#allocation3], 1
    %37 = vsyncpa [#allocation4], 1

// kernel: tpu_custom_call.1
$region0: #{tpu_custom_call.1}
  #allocation0 [shape = 'u32[]', space=smem, size = 0x4, offset = 0x4, fixed_abs, tag = 'smem constant byte address 0x4 - core index']
  #allocation1 [shape = 'u32[144,128]{1,0:T(1,128)}', space=vmem, size = 0x12000, scoped, tag = 'internal scratch']
  %s0 = inlined_call_operand.hbm [shape: f32[2,8,32], index: 0, kind: input, shape index: {}]
  %s1 = inlined_call_operand.hbm [shape: f32[32,32], index: 1, kind: input, shape index: {}]
  %s2 = inlined_call_operand.vmem [shape: f32[1,32], index: 2, kind: input, shape index: {}]
  %s3 = inlined_call_operand.hbm [shape: f32[32,32], index: 3, kind: input, shape index: {}]
  %s4 = inlined_call_operand.vmem [shape: f32[1,32], index: 4, kind: input, shape index: {}]
  %s5 = inlined_call_operand.hbm [shape: f32[32,32], index: 5, kind: input, shape index: {}]
  %s6 = inlined_call_operand.vmem [shape: f32[1,32], index: 6, kind: input, shape index: {}]
  %s7 = inlined_call_operand.hbm [shape: f32[2,4,8,8], index: 7, kind: output, shape index: {0}]
  %s8 = inlined_call_operand.hbm [shape: f32[2,4,8,8], index: 8, kind: output, shape index: {1}]
  %s9 = inlined_call_operand.hbm [shape: f32[2,4,8,8], index: 9, kind: output, shape index: {2}]
  %10 = xla_tuple %s7, %s8, %s9
  %s11 = sld [smem:[#allocation0]]
  $region93: #{tpu_custom_call.1} parent=0
    _
  %s13 = ssub.s32 1, %s11
  %s14 = scalar_select 0, %s13, %s11
  $region1: #{tpu_custom_call.1} parent=0
    #allocation2 [shape = 'u8[8192]{0}', space=vmem, size = 0x2000, scoped, tag = 'input window, operand 0']
    #allocation3 [shape = 's32[2]{0}', space=sflag, size = 0x8, scoped, tag = 'scoped memory for tpu_custom_call.1']
    #allocation4 [shape = 's32[2]{0}', space=sflag, size = 0x8, scoped, tag = 'scoped memory for tpu_custom_call.1']
    #allocation5 [shape = 'u8[16384]{0}', space=vmem, size = 0x4000, scoped, tag = 'input window, operand 1, single buffered']
    #allocation6 [shape = 's32[1]{0}', space=sflag, size = 0x4, scoped, tag = 'scoped memory for tpu_custom_call.1']
    #allocation7 [shape = 'u8[16384]{0}', space=vmem, size = 0x4000, scoped, tag = 'input window, operand 3, single buffered']
    #allocation8 [shape = 'u8[16384]{0}', space=vmem, size = 0x4000, scoped, tag = 'input window, operand 5, single buffered']
    #allocation9 [shape = 's32[1]{0}', space=sflag, size = 0x4, scoped, tag = 'scoped memory for tpu_custom_call.1']
    #allocation10 [shape = 'u8[32768]{0}', space=vmem, size = 0x8000, scoped, tag = 'output window, operand 0']
    #allocation11 [shape = 'u8[32768]{0}', space=vmem, size = 0x8000, scoped, tag = 'output window, operand 1']
    #allocation12 [shape = 's32[2]{0}', space=sflag, size = 0x8, scoped, tag = 'scoped memory for tpu_custom_call.1']
    #allocation13 [shape = 'u8[32768]{0}', space=vmem, size = 0x8000, scoped, tag = 'output window, operand 2']
    %15 = vsyncpa [#allocation3], 0
    %s16 = scalar_lea.sflag [#allocation3], 1
    %17 = vsyncpa %s16, 0
    %18 = vsyncpa [#allocation6], 0
    %19 = vsyncpa [#allocation9], 0
    %20 = vsyncpa [#allocation4], 0
    %s21 = scalar_lea.sflag [#allocation4], 1
    %22 = vsyncpa %s21, 0
    %23 = vsyncpa [#allocation12], 0
    %s24 = scalar_lea.sflag [#allocation12], 1
    %25 = vsyncpa %s24, 0
    loop: start=0, step=1, limit=4
    $region2: #{tpu_custom_call.1} parent=1 // loop_pre_header
      _
    $region3: #{tpu_custom_call.1} parent=1 // loop_header
      %s27 = sphi 0, %s31
      %p28 = scmp.ge.s32.totalorder %s27, 4
      %s34 = sphi 0, %s46
      %s35 = sphi 0, %s42
      %s36 = sphi 0, %s34
      %s37 = sphi 0, %s35
      %s38 = sphi 0, %s36
      %s39 = sphi 0, %s37
      %s51 = sphi 0, %s53
      %s54 = sphi 0, %s51
      %s55 = sphi 0, %s54
      %s71 = sphi 0, %s55
      %s75 = sphi 0, %s75
      %s77 = sphi 0, %s75
      %s78 = sphi 0, %s77
      %s92 = sphi 0, %s78
      %s96 = sphi 0, %s96
      %s98 = sphi 0, %s96
      %s99 = sphi 0, %s98
      %s113 = sphi 0, %s99
      %s117 = sphi 0, %s117
      %s119 = sphi 0, %s117
      %s120 = sphi 0, %s119
      %s134 = sphi 0, %s120
      %s138 = sphi 0, %s138
      %s140 = sphi 0, %s138
      %s141 = sphi 0, %s140
      %s155 = sphi 0, %s141
      %s159 = sphi 0, %s159
      %s161 = sphi 0, %s159
      %s162 = sphi 0, %s161
      %s176 = sphi 0, %s162
      %s180 = sphi 0, %s180
      %s182 = sphi 0, %s180
      %s183 = sphi 0, %s182
      %s197 = sphi 0, %s183
      %s205 = sphi 0, %s207
      %s208 = sphi 0, %s205
      %s209 = sphi 0, %s208
      %s225 = sphi 0, %s209
      %s233 = sphi 0, %s235
      %s236 = sphi 0, %s233
      %s237 = sphi 0, %s236
      %s253 = sphi 0, %s237
      %s261 = sphi 0, %s263
      %s264 = sphi 0, %s261
      %s265 = sphi 0, %s264
      %s281 = sphi 0, %s265
    $region4: #{tpu_custom_call.1} parent=1 // loop_header_branch
      %30 = sbr.rel (%p28) target = $region8
    $region5: #{tpu_custom_call.1} parent=1 // loop_body
      %s32 = ssub.s32 %s27, 1
      %s33 = ssub.s32 %s27, 2
      %s40 = sadd.s32 1, %s35
      %p41 = scmp.ge.s32.totalorder %s40, 1
      %s42 = scalar_select %p41, 0, %s40
      %s43 = sadd.s32 1, %s34
      %s44 = scalar_select %p41, %s43, %s34
      %p45 = scmp.ge.s32.totalorder %s44, 2
      %s46 = scalar_select %p45, 0, %s44
      %s47 = ssub.s32 %s34, %s46
      %s48 = ssub.s32 %s35, %s42
      %s49 = sor.u32 %s47, %s48
      %p50 = scmp.eq.s32.totalorder %s49, 0
      %s52 = sadd.s32 %s51, 1
      %s53 = scalar_select %p50, %s51, %s52
      %p56 = pneg %p50
      %p57 = scmp.eq.s32.totalorder %s27, 1
      %p58 = por %p56, %p57
      %p59 = scmp.ne.s32.totalorder %s51, %s54
      %p60 = scmp.eq.s32.totalorder %s27, 0
      %p61 = por %p59, %p60
      %p62 = scmp.ne.s32.totalorder %s51, %s54
      %p63 = scmp.eq.s32.totalorder %s32, 1
      %p64 = por %p62, %p63
      %p65 = scmp.ne.s32.totalorder %s54, %s55
      %p66 = scmp.eq.s32.totalorder %s32, 0
      %p67 = por %p65, %p66
      %p68 = scmp.ne.s32.totalorder %s54, %s55
      %p69 = scmp.eq.s32.totalorder %s33, 1
      %p70 = por %p68, %p69
      %p72 = scmp.ne.s32.totalorder %s55, %s71
      %p73 = scmp.eq.s32.totalorder %s33, 0
      %p74 = por %p72, %p73
      %s76 = sadd.s32 %s75, 1
      %p79 = scmp.eq.s32.totalorder %s27, 1
      %p80 = scmp.ne.s32.totalorder %s75, %s77
      %p81 = scmp.eq.s32.totalorder %s27, 0
      %p82 = por %p80, %p81
      %p83 = scmp.ne.s32.totalorder %s75, %s77
      %p84 = scmp.eq.s32.totalorder %s32, 1
      %p85 = por %p83, %p84
      %p86 = scmp.ne.s32.totalorder %s77, %s78
      %p87 = scmp.eq.s32.totalorder %s32, 0
      %p88 = por %p86, %p87
      %p89 = scmp.ne.s32.totalorder %s77, %s78
      %p90 = scmp.eq.s32.totalorder %s33, 1
      %p91 = por %p89, %p90
      %p93 = scmp.ne.s32.totalorder %s78, %s92
      %p94 = scmp.eq.s32.totalorder %s33, 0
      %p95 = por %p93, %p94
      %s97 = sadd.s32 %s96, 1
      %p100 = scmp.eq.s32.totalorder %s27, 1
      %p101 = scmp.ne.s32.totalorder %s96, %s98
      %p102 = scmp.eq.s32.totalorder %s27, 0
      %p103 = por %p101, %p102
      %p104 = scmp.ne.s32.totalorder %s96, %s98
      %p105 = scmp.eq.s32.totalorder %s32, 1
      %p106 = por %p104, %p105
      %p107 = scmp.ne.s32.totalorder %s98, %s99
      %p108 = scmp.eq.s32.totalorder %s32, 0
      %p109 = por %p107, %p108
      %p110 = scmp.ne.s32.totalorder %s98, %s99
      %p111 = scmp.eq.s32.totalorder %s33, 1
      %p112 = por %p110, %p111
      %p114 = scmp.ne.s32.totalorder %s99, %s113
      %p115 = scmp.eq.s32.totalorder %s33, 0
      %p116 = por %p114, %p115
      %s118 = sadd.s32 %s117, 1
      %p121 = scmp.eq.s32.totalorder %s27, 1
      %p122 = scmp.ne.s32.totalorder %s117, %s119
      %p123 = scmp.eq.s32.totalorder %s27, 0
      %p124 = por %p122, %p123
      %p125 = scmp.ne.s32.totalorder %s117, %s119
      %p126 = scmp.eq.s32.totalorder %s32, 1
      %p127 = por %p125, %p126
      %p128 = scmp.ne.s32.totalorder %s119, %s120
      %p129 = scmp.eq.s32.totalorder %s32, 0
      %p130 = por %p128, %p129
      %p131 = scmp.ne.s32.totalorder %s119, %s120
      %p132 = scmp.eq.s32.totalorder %s33, 1
      %p133 = por %p131, %p132
      %p135 = scmp.ne.s32.totalorder %s120, %s134
      %p136 = scmp.eq.s32.totalorder %s33, 0
      %p137 = por %p135, %p136
      %s139 = sadd.s32 %s138, 1
      %p142 = scmp.eq.s32.totalorder %s27, 1
      %p143 = scmp.ne.s32.totalorder %s138, %s140
      %p144 = scmp.eq.s32.totalorder %s27, 0
      %p145 = por %p143, %p144
      %p146 = scmp.ne.s32.totalorder %s138, %s140
      %p147 = scmp.eq.s32.totalorder %s32, 1
      %p148 = por %p146, %p147
      %p149 = scmp.ne.s32.totalorder %s140, %s141
      %p150 = scmp.eq.s32.totalorder %s32, 0
      %p151 = por %p149, %p150
      %p152 = scmp.ne.s32.totalorder %s140, %s141
      %p153 = scmp.eq.s32.totalorder %s33, 1
      %p154 = por %p152, %p153
      %p156 = scmp.ne.s32.totalorder %s141, %s155
      %p157 = scmp.eq.s32.totalorder %s33, 0
      %p158 = por %p156, %p157
      %s160 = sadd.s32 %s159, 1
      %p163 = scmp.eq.s32.totalorder %s27, 1
      %p164 = scmp.ne.s32.totalorder %s159, %s161
      %p165 = scmp.eq.s32.totalorder %s27, 0
      %p166 = por %p164, %p165
      %p167 = scmp.ne.s32.totalorder %s159, %s161
      %p168 = scmp.eq.s32.totalorder %s32, 1
      %p169 = por %p167, %p168
      %p170 = scmp.ne.s32.totalorder %s161, %s162
      %p171 = scmp.eq.s32.totalorder %s32, 0
      %p172 = por %p170, %p171
      %p173 = scmp.ne.s32.totalorder %s161, %s162
      %p174 = scmp.eq.s32.totalorder %s33, 1
      %p175 = por %p173, %p174
      %p177 = scmp.ne.s32.totalorder %s162, %s176
      %p178 = scmp.eq.s32.totalorder %s33, 0
      %p179 = por %p177, %p178
      %s181 = sadd.s32 %s180, 1
      %p184 = scmp.eq.s32.totalorder %s27, 1
      %p185 = scmp.ne.s32.totalorder %s180, %s182
      %p186 = scmp.eq.s32.totalorder %s27, 0
      %p187 = por %p185, %p186
      %p188 = scmp.ne.s32.totalorder %s180, %s182
      %p189 = scmp.eq.s32.totalorder %s32, 1
      %p190 = por %p188, %p189
      %p191 = scmp.ne.s32.totalorder %s182, %s183
      %p192 = scmp.eq.s32.totalorder %s32, 0
      %p193 = por %p191, %p192
      %p194 = scmp.ne.s32.totalorder %s182, %s183
      %p195 = scmp.eq.s32.totalorder %s33, 1
      %p196 = por %p194, %p195
      %p198 = scmp.ne.s32.totalorder %s183, %s197
      %p199 = scmp.eq.s32.totalorder %s33, 0
      %p200 = por %p198, %p199
      %s201 = ssub.s32 %s34, %s46
      %s202 = ssub.s32 %s35, %s42
      %s203 = sor.u32 %s201, %s202
      %p204 = scmp.eq.s32.totalorder %s203, 0
      %s206 = sadd.s32 %s205, 1
      %s207 = scalar_select %p204, %s205, %s206
      %p210 = pneg %p204
      %p211 = scmp.eq.s32.totalorder %s27, 1
      %p212 = por %p210, %p211
      %p213 = scmp.ne.s32.totalorder %s205, %s208
      %p214 = scmp.eq.s32.totalorder %s27, 0
      %p215 = por %p213, %p214
      %p216 = scmp.ne.s32.totalorder %s205, %s208
      %p217 = scmp.eq.s32.totalorder %s32, 1
      %p218 = por %p216, %p217
      %p219 = scmp.ne.s32.totalorder %s208, %s209
      %p220 = scmp.eq.s32.totalorder %s32, 0
      %p221 = por %p219, %p220
      %p222 = scmp.ne.s32.totalorder %s208, %s209
      %p223 = scmp.eq.s32.totalorder %s33, 1
      %p224 = por %p222, %p223
      %p226 = scmp.ne.s32.totalorder %s209, %s225
      %p227 = scmp.eq.s32.totalorder %s33, 0
      %p228 = por %p226, %p227
      %s229 = ssub.s32 %s34, %s46
      %s230 = ssub.s32 %s35, %s42
      %s231 = sor.u32 %s229, %s230
      %p232 = scmp.eq.s32.totalorder %s231, 0
      %s234 = sadd.s32 %s233, 1
      %s235 = scalar_select %p232, %s233, %s234
      %p238 = pneg %p232
      %p239 = scmp.eq.s32.totalorder %s27, 1
      %p240 = por %p238, %p239
      %p241 = scmp.ne.s32.totalorder %s233, %s236
      %p242 = scmp.eq.s32.totalorder %s27, 0
      %p243 = por %p241, %p242
      %p244 = scmp.ne.s32.totalorder %s233, %s236
      %p245 = scmp.eq.s32.totalorder %s32, 1
      %p246 = por %p244, %p245
      %p247 = scmp.ne.s32.totalorder %s236, %s237
      %p248 = scmp.eq.s32.totalorder %s32, 0
      %p249 = por %p247, %p248
      %p250 = scmp.ne.s32.totalorder %s236, %s237
      %p251 = scmp.eq.s32.totalorder %s33, 1
      %p252 = por %p250, %p251
      %p254 = scmp.ne.s32.totalorder %s237, %s253
      %p255 = scmp.eq.s32.totalorder %s33, 0
      %p256 = por %p254, %p255
      %s257 = ssub.s32 %s34, %s46
      %s258 = ssub.s32 %s35, %s42
      %s259 = sor.u32 %s257, %s258
      %p260 = scmp.eq.s32.totalorder %s259, 0
      %s262 = sadd.s32 %s261, 1
      %s263 = scalar_select %p260, %s261, %s262
      %p266 = pneg %p260
      %p267 = scmp.eq.s32.totalorder %s27, 1
      %p268 = por %p266, %p267
      %p269 = scmp.ne.s32.totalorder %s261, %s264
      %p270 = scmp.eq.s32.totalorder %s27, 0
      %p271 = por %p269, %p270
      %p272 = scmp.ne.s32.totalorder %s261, %s264
      %p273 = scmp.eq.s32.totalorder %s32, 1
      %p274 = por %p272, %p273
      %p275 = scmp.ne.s32.totalorder %s264, %s265
      %p276 = scmp.eq.s32.totalorder %s32, 0
      %p277 = por %p275, %p276
      %p278 = scmp.ne.s32.totalorder %s264, %s265
      %p279 = scmp.eq.s32.totalorder %s33, 1
      %p280 = por %p278, %p279
      %p282 = scmp.ne.s32.totalorder %s265, %s281
      %p283 = scmp.eq.s32.totalorder %s33, 0
      %p284 = por %p282, %p283
      %p285 = scmp.le.s32.totalorder 1, %s27
      %p286 = scmp.lt.s32.totalorder %s27, 3
      %p287 = pnand %p285, %p286
      %p288 = pneg %p287
      // Predicated region
      $region9: #{tpu_custom_call.1} parent=5 // pred_check
        _
      $region10: #{tpu_custom_call.1} parent=5 // pred_check_branch
        %290 = sbr.rel (%p287) target = $region12
      $region11: #{tpu_custom_call.1} parent=5 // pred_region
        %s291 = ssub.s32 %s27, 1
        // Predicated region
        $region13: #{tpu_custom_call.1} parent=11 // pred_check
          %p292 = pneg %p88
        $region14: #{tpu_custom_call.1} parent=11 // pred_check_branch
          %294 = sbr.rel (%p292) target = $region16
        $region15: #{tpu_custom_call.1} parent=11 // pred_region
          %s296 = ssub.s32 512, 512
          %297 = vsyncadd [#allocation6], %s296
          %s298 = sshll.u32 [#allocation5], 4
          %s299 = int_to_ptr.vmem [resolvable:$true] %s298
          %304 = dma.hbm_to_vmem [thread:$0]  %s1, 512, %s299, [#allocation6], 128, 128, 8
        $region16: #{tpu_custom_call.1} parent=11 // pred_fallthru
          _
        // Predicated region
        $region17: #{tpu_custom_call.1} parent=11 // pred_check
          %p305 = pneg %p109
        $region18: #{tpu_custom_call.1} parent=11 // pred_check_branch
          %307 = sbr.rel (%p305) target = $region20
        $region19: #{tpu_custom_call.1} parent=11 // pred_region
          _
        $region20: #{tpu_custom_call.1} parent=11 // pred_fallthru
          _
        // Predicated region
        $region21: #{tpu_custom_call.1} parent=11 // pred_check
          %p308 = pneg %p130
        $region22: #{tpu_custom_call.1} parent=11 // pred_check_branch
          %310 = sbr.rel (%p308) target = $region24
        $region23: #{tpu_custom_call.1} parent=11 // pred_region
          %s312 = ssub.s32 512, 512
          %313 = vsyncadd [#allocation6], %s312
          %s314 = sshll.u32 [#allocation7], 4
          %s315 = int_to_ptr.vmem [resolvable:$true] %s314
          %320 = dma.hbm_to_vmem [thread:$0]  %s3, 512, %s315, [#allocation6], 128, 128, 8
        $region24: #{tpu_custom_call.1} parent=11 // pred_fallthru
          _
        // Predicated region
        $region25: #{tpu_custom_call.1} parent=11 // pred_check
          %p321 = pneg %p151
        $region26: #{tpu_custom_call.1} parent=11 // pred_check_branch
          %323 = sbr.rel (%p321) target = $region28
        $region27: #{tpu_custom_call.1} parent=11 // pred_region
          _
        $region28: #{tpu_custom_call.1} parent=11 // pred_fallthru
          _
        // Predicated region
        $region29: #{tpu_custom_call.1} parent=11 // pred_check
          %p324 = pneg %p172
        $region30: #{tpu_custom_call.1} parent=11 // pred_check_branch
          %326 = sbr.rel (%p324) target = $region32
        $region31: #{tpu_custom_call.1} parent=11 // pred_region
          %s328 = ssub.s32 512, 512
          %329 = vsyncadd [#allocation9], %s328
          %s330 = sshll.u32 [#allocation8], 4
          %s331 = int_to_ptr.vmem [resolvable:$true] %s330
          %336 = dma.hbm_to_vmem [thread:$0]  %s5, 512, %s331, [#allocation9], 128, 128, 8
        $region32: #{tpu_custom_call.1} parent=11 // pred_fallthru
          _
        // Predicated region
        $region33: #{tpu_custom_call.1} parent=11 // pred_check
          %p337 = pneg %p193
        $region34: #{tpu_custom_call.1} parent=11 // pred_check_branch
          %339 = sbr.rel (%p337) target = $region36
        $region35: #{tpu_custom_call.1} parent=11 // pred_region
          _
        $region36: #{tpu_custom_call.1} parent=11 // pred_fallthru
          _
      $region12: #{tpu_custom_call.1} parent=5 // pred_fallthru
        _
      %p340 = scmp.lt.s32.totalorder %s27, 2
      // Predicated region
      $region37: #{tpu_custom_call.1} parent=5 // pred_check
        %p341 = pneg %p340
      $region38: #{tpu_custom_call.1} parent=5 // pred_check_branch
        %343 = sbr.rel (%p341) target = $region40
      $region39: #{tpu_custom_call.1} parent=5 // pred_region
        // Predicated region
        $region41: #{tpu_custom_call.1} parent=39 // pred_check
          %p344 = pneg %p61
        $region42: #{tpu_custom_call.1} parent=39 // pred_check_branch
          %346 = sbr.rel (%p344) target = $region44
        $region43: #{tpu_custom_call.1} parent=39 // pred_region
          %s347 = sand.u32 %s51, 1
          %s348 = scalar_lea.sflag [#allocation3], %s347
          %s349 = sand.u32 %s51, 1
          %s350 = smul.addr %s349, 8
          %s351 = scalar_lea.vmem [#allocation2], %s350
          %s353 = ssub.s32 128, 128
          %354 = vsyncadd %s348, %s353
          %s355 = sadd.s32 %s35, %s34
          %s356 = smul.addr %s355, 128
          %s357 = scalar_lea.hbm %s0, %s356
          %s359 = sshll.u32 %s351, 4
          %s360 = int_to_ptr.vmem [resolvable:$true] %s359
          %362 = dma.hbm_to_vmem [thread:$0]  %s357, 128, %s360, %s348
        $region44: #{tpu_custom_call.1} parent=39 // pred_fallthru
          _
      $region40: #{tpu_custom_call.1} parent=5 // pred_fallthru
        _
      %p363 = scmp.le.s32.totalorder 1, %s27
      %p364 = scmp.lt.s32.totalorder %s27, 3
      %p365 = pnand %p363, %p364
      %p366 = pneg %p365
      // Predicated region
      $region45: #{tpu_custom_call.1} parent=5 // pred_check
        _
      $region46: #{tpu_custom_call.1} parent=5 // pred_check_branch
        %368 = sbr.rel (%p365) target = $region48
      $region47: #{tpu_custom_call.1} parent=5 // pred_region
        %s369 = ssub.s32 %s27, 1
        %s370 = sand.u32 %s54, 1
        %s371 = scalar_lea.sflag [#allocation3], %s370
        %s372 = sand.u32 %s54, 1
        %s373 = smul.addr %s372, 8
        %s374 = scalar_lea.vmem [#allocation2], %s373
        // Predicated region
        $region49: #{tpu_custom_call.1} parent=47 // pred_check
          %p375 = pneg %p67
        $region50: #{tpu_custom_call.1} parent=47 // pred_check_branch
          %377 = sbr.rel (%p375) target = $region52
        $region51: #{tpu_custom_call.1} parent=47 // pred_region
          %378 = dma.done %s371, 128
        $region52: #{tpu_custom_call.1} parent=47 // pred_fallthru
          _
        // Predicated region
        $region53: #{tpu_custom_call.1} parent=47 // pred_check
          %p379 = pneg %p88
        $region54: #{tpu_custom_call.1} parent=47 // pred_check_branch
          %381 = sbr.rel (%p379) target = $region56
        $region55: #{tpu_custom_call.1} parent=47 // pred_region
          %382 = dma.done [#allocation6], 512
        $region56: #{tpu_custom_call.1} parent=47 // pred_fallthru
          _
        // Predicated region
        $region57: #{tpu_custom_call.1} parent=47 // pred_check
          %p383 = pneg %p130
        $region58: #{tpu_custom_call.1} parent=47 // pred_check_branch
          %385 = sbr.rel (%p383) target = $region60
        $region59: #{tpu_custom_call.1} parent=47 // pred_region
          %386 = dma.done [#allocation6], 512
        $region60: #{tpu_custom_call.1} parent=47 // pred_fallthru
          _
        // Predicated region
        $region61: #{tpu_custom_call.1} parent=47 // pred_check
          %p387 = pneg %p172
        $region62: #{tpu_custom_call.1} parent=47 // pred_check_branch
          %389 = sbr.rel (%p387) target = $region64
        $region63: #{tpu_custom_call.1} parent=47 // pred_region
          %390 = dma.done [#allocation9], 512
        $region64: #{tpu_custom_call.1} parent=47 // pred_fallthru
          _
        %s391 = sand.u32 %s54, 1
        %s392 = scalar_lea.sflag [#allocation3], %s391
        %s393 = sand.u32 %s54, 1
        %s394 = smul.addr %s393, 8
        %s395 = scalar_lea.vmem [#allocation2], %s394
        %p396 = pneg %p67
        %p397 = pneg %p64
        %p398 = pneg %p88
        %p399 = pneg %p85
        %p400 = pneg %p109
        %p401 = pneg %p106
        %p402 = pneg %p130
        %p403 = pneg %p127
        %p404 = pneg %p151
        %p405 = pneg %p148
        %p406 = pneg %p172
        %p407 = pneg %p169
        %p408 = pneg %p193
        %p409 = pneg %p190
        %p410 = pneg %p221
        %p411 = pneg %p218
        %s412 = sand.u32 %s208, 1
        %s413 = scalar_lea.sflag [#allocation4], %s412
        %s414 = sand.u32 %s208, 1
        %s415 = smul.addr %s414, 32
        %s416 = scalar_lea.vmem [#allocation10], %s415
        %p417 = pneg %p249
        %p418 = pneg %p246
        %s419 = sand.u32 %s32, 1
        %s420 = scalar_lea.sflag [#allocation12], %s419
        %s421 = sand.u32 %s236, 1
        %s422 = smul.addr %s421, 32
        %s423 = scalar_lea.vmem [#allocation11], %s422
        %p424 = pneg %p277
        %p425 = pneg %p274
        %s426 = sand.u32 %s32, 1
        %s427 = scalar_lea.sflag [#allocation12], %s426
        %s428 = sand.u32 %s264, 1
        %s429 = smul.addr %s428, 32
        %s430 = scalar_lea.vmem [#allocation13], %s429
        %v431 = vld [vmem:[%s374] sm:$0xff]
        %v432 = vld [vmem:[#allocation5] sm:$0xff]
        %v433 = vld [vmem:[#allocation5 + $0x8] sm:$0xff]
        %v434 = vld [vmem:[#allocation5 + $0x10] sm:$0xff]
        %v435 = vld [vmem:[#allocation5 + $0x18] sm:$0xff]
        %v436 = vld [vmem:[%s2] sm:$0x1]
        %v438 = vlaneseq
        %v439 = vshrl.u32 %v438, 7
        %v440 = vsub.s32 0, %v439
        %v441 = vrot.slane %v436, %v440
        %vm443 = vcmask 261120
        %v445 = vsel %vm443, %v431, 0
        %447 = vmatprep.subr.mxu0 0.0
        %448 = vmatpush1.msra.mxu0 %v432
        %449 = vmatprep.subr.mxu0 0.0
        %450 = vmatpush1.msra.mxu0 %v433
        %451 = vmatprep.subr.mxu0 0.0
        %452 = vmatpush1.msra.mxu0 %v434
        %453 = vmatprep.subr.mxu0 0.0
        %454 = vmatpush1.msra.mxu0 %v435
        %455 = vmatprep.subr.mxu0 0.0
        %456 = vmatpush1.msra.mxu0 0.0
        %457 = vmatprep.subr.mxu0 0.0
        %458 = vmatpush1.msra.mxu0 0.0
        %459 = vmatprep.subr.mxu0 0.0
        %460 = vmatpush1.msra.mxu0 0.0
        %461 = vmatprep.subr.mxu0 0.0
        %462 = vmatpush1.msra.mxu0 0.0
        %463 = vmatprep.subr.mxu0 0.0
        %464 = vmatpush1.msra.mxu0 0.0
        %465 = vmatprep.subr.mxu0 0.0
        %466 = vmatpush1.msra.mxu0 0.0
        %467 = vmatprep.subr.mxu0 0.0
        %468 = vmatpush1.msra.mxu0 0.0
        %469 = vmatprep.subr.mxu0 0.0
        %470 = vmatpush1.msra.mxu0 0.0
        %471 = vmatprep.subr.mxu0 0.0
        %472 = vmatpush1.msra.mxu0 0.0
        %473 = vmatprep.subr.mxu0 0.0
        %474 = vmatpush1.msra.mxu0 0.0
        %475 = vmatprep.subr.mxu0 0.0
        %476 = vmatpush1.msra.mxu0 0.0
        %477 = vmatprep.subr.mxu0 0.0
        %478 = vmatpush1.msra.mxu0 0.0
        %479 = vmatprep.subr.mxu0 0.0
        %480 = vmatpush1.msra.mxu0 0.0
        %481 = vmatprep.subr.mxu0 0.0
        %482 = vmatpush1.msra.mxu0 0.0
        %483 = vmatprep.subr.mxu0 0.0
        %484 = vmatpush1.msra.mxu0 0.0
        %485 = vmatprep.subr.mxu0 0.0
        %486 = vmatpush1.msra.mxu0 0.0
        %487 = vmatprep.subr.mxu0 0.0
        %488 = vmatpush1.msra.mxu0 0.0
        %489 = vmatprep.subr.mxu0 0.0
        %490 = vmatpush1.msra.mxu0 0.0
        %491 = vmatprep.subr.mxu0 0.0
        %492 = vmatpush1.msra.mxu0 0.0
        %493 = vmatprep.subr.mxu0 0.0
        %494 = vmatpush1.msra.mxu0 0.0
        %495 = vmatprep.subr.mxu0 0.0
        %496 = vmatpush1.msra.mxu0 0.0
        %497 = vmatprep.subr.mxu0 0.0
        %498 = vmatpush1.msra.mxu0 0.0
        %499 = vmatprep.subr.mxu0 0.0
        %500 = vmatpush1.msra.mxu0 0.0
        %501 = vmatprep.subr.mxu0 0.0
        %502 = vmatpush1.msra.mxu0 0.0
        %503 = vmatprep.subr.mxu0 0.0
        %504 = vmatpush1.msra.mxu0 0.0
        %505 = vmatprep.subr.mxu0 0.0
        %506 = vmatpush1.msra.mxu0 0.0
        %507 = vmatprep.subr.mxu0 0.0
        %508 = vmatpush1.msra.mxu0 0.0
        %509 = vmatprep.subr.mxu0 0.0
        %510 = vmatpush1.msra.mxu0 0.0
        %511 = vmatprep.mubr.f32.mxu0 0.0
        %512 = vmatmul.mubr.f32.gmra.mrb[0].mxu0 %v445
        %v513 = vpop.f32.mrb[0].mxu0
        %v514 = vadd.f32 %v441, %v513
        %v515 = vpop.f32.mrb[0].mxu0
        %516 = vdwg.mxu0
        %v517 = vmul.f32 %v514, 0.35355338
        %v518 = vld [vmem:[#allocation7] sm:$0xff]
        %v519 = vld [vmem:[#allocation7 + $0x8] sm:$0xff]
        %v520 = vld [vmem:[#allocation7 + $0x10] sm:$0xff]
        %v521 = vld [vmem:[#allocation7 + $0x18] sm:$0xff]
        %v522 = vld [vmem:[%s4] sm:$0x1]
        %v524 = vlaneseq
        %v525 = vshrl.u32 %v524, 7
        %v526 = vsub.s32 0, %v525
        %v527 = vrot.slane %v522, %v526
        %529 = vmatprep.subr.mxu0 0.0
        %530 = vmatpush1.msra.mxu0 %v518
        %531 = vmatprep.subr.mxu0 0.0
        %532 = vmatpush1.msra.mxu0 %v519
        %533 = vmatprep.subr.mxu0 0.0
        %534 = vmatpush1.msra.mxu0 %v520
        %535 = vmatprep.subr.mxu0 0.0
        %536 = vmatpush1.msra.mxu0 %v521
        %537 = vmatprep.subr.mxu0 0.0
        %538 = vmatpush1.msra.mxu0 0.0
        %539 = vmatprep.subr.mxu0 0.0
        %540 = vmatpush1.msra.mxu0 0.0
        %541 = vmatprep.subr.mxu0 0.0
        %542 = vmatpush1.msra.mxu0 0.0
        %543 = vmatprep.subr.mxu0 0.0
        %544 = vmatpush1.msra.mxu0 0.0
        %545 = vmatprep.subr.mxu0 0.0
        %546 = vmatpush1.msra.mxu0 0.0
        %547 = vmatprep.subr.mxu0 0.0
        %548 = vmatpush1.msra.mxu0 0.0
        %549 = vmatprep.subr.mxu0 0.0
        %550 = vmatpush1.msra.mxu0 0.0
        %551 = vmatprep.subr.mxu0 0.0
        %552 = vmatpush1.msra.mxu0 0.0
        %553 = vmatprep.subr.mxu0 0.0
        %554 = vmatpush1.msra.mxu0 0.0
        %555 = vmatprep.subr.mxu0 0.0
        %556 = vmatpush1.msra.mxu0 0.0
        %557 = vmatprep.subr.mxu0 0.0
        %558 = vmatpush1.msra.mxu0 0.0
        %559 = vmatprep.subr.mxu0 0.0
        %560 = vmatpush1.msra.mxu0 0.0
        %561 = vmatprep.subr.mxu0 0.0
        %562 = vmatpush1.msra.mxu0 0.0
        %563 = vmatprep.subr.mxu0 0.0
        %564 = vmatpush1.msra.mxu0 0.0
        %565 = vmatprep.subr.mxu0 0.0
        %566 = vmatpush1.msra.mxu0 0.0
        %567 = vmatprep.subr.mxu0 0.0
        %568 = vmatpush1.msra.mxu0 0.0
        %569 = vmatprep.subr.mxu0 0.0
        %570 = vmatpush1.msra.mxu0 0.0
        %571 = vmatprep.subr.mxu0 0.0
        %572 = vmatpush1.msra.mxu0 0.0
        %573 = vmatprep.subr.mxu0 0.0
        %574 = vmatpush1.msra.mxu0 0.0
        %575 = vmatprep.subr.mxu0 0.0
        %576 = vmatpush1.msra.mxu0 0.0
        %577 = vmatprep.subr.mxu0 0.0
        %578 = vmatpush1.msra.mxu0 0.0
        %579 = vmatprep.subr.mxu0 0.0
        %580 = vmatpush1.msra.mxu0 0.0
        %581 = vmatprep.subr.mxu0 0.0
        %582 = vmatpush1.msra.mxu0 0.0
        %583 = vmatprep.subr.mxu0 0.0
        %584 = vmatpush1.msra.mxu0 0.0
        %585 = vmatprep.subr.mxu0 0.0
        %586 = vmatpush1.msra.mxu0 0.0
        %587 = vmatprep.subr.mxu0 0.0
        %588 = vmatpush1.msra.mxu0 0.0
        %589 = vmatprep.subr.mxu0 0.0
        %590 = vmatpush1.msra.mxu0 0.0
        %591 = vmatprep.subr.mxu0 0.0
        %592 = vmatpush1.msra.mxu0 0.0
        %593 = vmatprep.mubr.f32.mxu0 0.0
        %594 = vmatmul.mubr.f32.gmra.mrb[0].mxu0 %v445
        %v595 = vpop.f32.mrb[0].mxu0
        %v596 = vadd.f32 %v527, %v595
        %v597 = vpop.f32.mrb[0].mxu0
        %598 = vdwg.mxu0
        %v599 = vld [vmem:[#allocation8] sm:$0xff]
        %v600 = vld [vmem:[#allocation8 + $0x8] sm:$0xff]
        %v601 = vld [vmem:[#allocation8 + $0x10] sm:$0xff]
        %v602 = vld [vmem:[#allocation8 + $0x18] sm:$0xff]
        %v603 = vld [vmem:[%s6] sm:$0x1]
        %v605 = vlaneseq
        %v606 = vshrl.u32 %v605, 7
        %v607 = vsub.s32 0, %v606
        %v608 = vrot.slane %v603, %v607
        %610 = vmatprep.subr.mxu0 0.0
        %611 = vmatpush1.msra.mxu0 %v599
        %612 = vmatprep.subr.mxu0 0.0
        %613 = vmatpush1.msra.mxu0 %v600
        %614 = vmatprep.subr.mxu0 0.0
        %615 = vmatpush1.msra.mxu0 %v601
        %616 = vmatprep.subr.mxu0 0.0
        %617 = vmatpush1.msra.mxu0 %v602
        %618 = vmatprep.subr.mxu0 0.0
        %619 = vmatpush1.msra.mxu0 0.0
        %620 = vmatprep.subr.mxu0 0.0
        %621 = vmatpush1.msra.mxu0 0.0
        %622 = vmatprep.subr.mxu0 0.0
        %623 = vmatpush1.msra.mxu0 0.0
        %624 = vmatprep.subr.mxu0 0.0
        %625 = vmatpush1.msra.mxu0 0.0
        %626 = vmatprep.subr.mxu0 0.0
        %627 = vmatpush1.msra.mxu0 0.0
        %628 = vmatprep.subr.mxu0 0.0
        %629 = vmatpush1.msra.mxu0 0.0
        %630 = vmatprep.subr.mxu0 0.0
        %631 = vmatpush1.msra.mxu0 0.0
        %632 = vmatprep.subr.mxu0 0.0
        %633 = vmatpush1.msra.mxu0 0.0
        %634 = vmatprep.subr.mxu0 0.0
        %635 = vmatpush1.msra.mxu0 0.0
        %636 = vmatprep.subr.mxu0 0.0
        %637 = vmatpush1.msra.mxu0 0.0
        %638 = vmatprep.subr.mxu0 0.0
        %639 = vmatpush1.msra.mxu0 0.0
        %640 = vmatprep.subr.mxu0 0.0
        %641 = vmatpush1.msra.mxu0 0.0
        %642 = vmatprep.subr.mxu0 0.0
        %643 = vmatpush1.msra.mxu0 0.0
        %644 = vmatprep.subr.mxu0 0.0
        %645 = vmatpush1.msra.mxu0 0.0
        %646 = vmatprep.subr.mxu0 0.0
        %647 = vmatpush1.msra.mxu0 0.0
        %648 = vmatprep.subr.mxu0 0.0
        %649 = vmatpush1.msra.mxu0 0.0
        %650 = vmatprep.subr.mxu0 0.0
        %651 = vmatpush1.msra.mxu0 0.0
        %652 = vmatprep.subr.mxu0 0.0
        %653 = vmatpush1.msra.mxu0 0.0
        %654 = vmatprep.subr.mxu0 0.0
        %655 = vmatpush1.msra.mxu0 0.0
        %656 = vmatprep.subr.mxu0 0.0
        %657 = vmatpush1.msra.mxu0 0.0
        %658 = vmatprep.subr.mxu0 0.0
        %659 = vmatpush1.msra.mxu0 0.0
        %660 = vmatprep.subr.mxu0 0.0
        %661 = vmatpush1.msra.mxu0 0.0
        %662 = vmatprep.subr.mxu0 0.0
        %663 = vmatpush1.msra.mxu0 0.0
        %664 = vmatprep.subr.mxu0 0.0
        %665 = vmatpush1.msra.mxu0 0.0
        %666 = vmatprep.subr.mxu0 0.0
        %667 = vmatpush1.msra.mxu0 0.0
        %668 = vmatprep.subr.mxu0 0.0
        %669 = vmatpush1.msra.mxu0 0.0
        %670 = vmatprep.subr.mxu0 0.0
        %671 = vmatpush1.msra.mxu0 0.0
        %672 = vmatprep.subr.mxu0 0.0
        %673 = vmatpush1.msra.mxu0 0.0
        %674 = vmatprep.mubr.f32.mxu0 0.0
        %675 = vmatmul.mubr.f32.gmra.mrb[0].mxu0 %v445
        %v676 = vpop.f32.mrb[0].mxu0
        %v677 = vadd.f32 %v608, %v676
        %v678 = vpop.f32.mrb[0].mxu0
        %679 = vdwg.mxu0
        %vm680 = vcmask 64512
        %681 = vst.msk [vmem:[%s416] sm:$0xff] %vm680, %v517
        %682 = vst.msk [vmem:[%s423] sm:$0xff] %vm680, %v596
        %683 = vst.msk [vmem:[%s430] sm:$0xff] %vm680, %v677
        %685 = vrot.lane.b32.xlu0 %v517, 120
        %v686 = vpop.permute.xlu0 %685
        %s688 = scalar_lea.vmem %s416, 8 [#allocation10]
        %689 = vst.msk [vmem:[%s688] sm:$0xff] %vm680, %v686
        %691 = vrot.lane.b32.xlu0 %v596, 120
        %v692 = vpop.permute.xlu0 %691
        %s694 = scalar_lea.vmem %s423, 8 [#allocation11]
        %695 = vst.msk [vmem:[%s694] sm:$0xff] %vm680, %v692
        %697 = vrot.lane.b32.xlu0 %v677, 120
        %v698 = vpop.permute.xlu0 %697
        %s700 = scalar_lea.vmem %s430, 8 [#allocation13]
        %701 = vst.msk [vmem:[%s700] sm:$0xff] %vm680, %v698
        %702 = vrot.lane.b32.xlu0 %v517, 112
        %v703 = vpop.permute.xlu0 %702
        %s705 = scalar_lea.vmem %s416, 16 [#allocation10]
        %706 = vst.msk [vmem:[%s705] sm:$0xff] %vm680, %v703
        %707 = vrot.lane.b32.xlu0 %v596, 112
        %v708 = vpop.permute.xlu0 %707
        %s710 = scalar_lea.vmem %s423, 16 [#allocation11]
        %711 = vst.msk [vmem:[%s710] sm:$0xff] %vm680, %v708
        %712 = vrot.lane.b32.xlu0 %v677, 112
        %v713 = vpop.permute.xlu0 %712
        %s715 = scalar_lea.vmem %s430, 16 [#allocation13]
        %716 = vst.msk [vmem:[%s715] sm:$0xff] %vm680, %v713
        %717 = vrot.lane.b32.xlu0 %v517, 104
        %v718 = vpop.permute.xlu0 %717
        %s720 = scalar_lea.vmem %s416, 24 [#allocation10]
        %721 = vst.msk [vmem:[%s720] sm:$0xff] %vm680, %v718
        %722 = vrot.lane.b32.xlu0 %v596, 104
        %v723 = vpop.permute.xlu0 %722
        %s725 = scalar_lea.vmem %s423, 24 [#allocation11]
        %726 = vst.msk [vmem:[%s725] sm:$0xff] %vm680, %v723
        %727 = vrot.lane.b32.xlu0 %v677, 104
        %v728 = vpop.permute.xlu0 %727
        %s730 = scalar_lea.vmem %s430, 24 [#allocation13]
        %731 = vst.msk [vmem:[%s730] sm:$0xff] %vm680, %v728
        %s732 = sand.u32 %s208, 1
        %s733 = scalar_lea.sflag [#allocation4], %s732
        %s734 = sand.u32 %s208, 1
        %s735 = smul.addr %s734, 32
        %s736 = scalar_lea.vmem [#allocation10], %s735
        %s737 = sand.u32 %s32, 1
        %s738 = scalar_lea.sflag [#allocation12], %s737
        %s739 = sand.u32 %s236, 1
        %s740 = smul.addr %s739, 32
        %s741 = scalar_lea.vmem [#allocation11], %s740
        %s742 = sand.u32 %s32, 1
        %s743 = scalar_lea.sflag [#allocation12], %s742
        %s744 = sand.u32 %s264, 1
        %s745 = smul.addr %s744, 32
        %s746 = scalar_lea.vmem [#allocation13], %s745
        // Predicated region
        $region65: #{tpu_custom_call.1} parent=47 // pred_check
          %p747 = pneg %p218
        $region66: #{tpu_custom_call.1} parent=47 // pred_check_branch
          %749 = sbr.rel (%p747) target = $region68
        $region67: #{tpu_custom_call.1} parent=47 // pred_region
          %s751 = ssub.s32 512, 512
          %752 = vsyncadd %s733, %s751
          %s753 = smul.addr %s36, 4
          %s754 = sadd.s32 %s37, %s753
          %s755 = smul.addr %s754, 128
          %s756 = scalar_lea.hbm %s7, %s755
          %s757 = sshll.u32 %s736, 4
          %s758 = int_to_ptr.vmem [resolvable:$true] %s757
          %763 = dma.vmem_to_hbm [thread:$0]  %s758, 512, %s756, %s733, 128, 128, 8
        $region68: #{tpu_custom_call.1} parent=47 // pred_fallthru
          _
        // Predicated region
        $region69: #{tpu_custom_call.1} parent=47 // pred_check
          %p764 = pneg %p246
        $region70: #{tpu_custom_call.1} parent=47 // pred_check_branch
          %766 = sbr.rel (%p764) target = $region72
        $region71: #{tpu_custom_call.1} parent=47 // pred_region
          %s768 = ssub.s32 512, 512
          %769 = vsyncadd %s738, %s768
          %s770 = smul.addr %s36, 4
          %s771 = sadd.s32 %s37, %s770
          %s772 = smul.addr %s771, 128
          %s773 = scalar_lea.hbm %s8, %s772
          %s774 = sshll.u32 %s741, 4
          %s775 = int_to_ptr.vmem [resolvable:$true] %s774
          %780 = dma.vmem_to_hbm [thread:$0]  %s775, 512, %s773, %s738, 128, 128, 8
        $region72: #{tpu_custom_call.1} parent=47 // pred_fallthru
          _
        // Predicated region
        $region73: #{tpu_custom_call.1} parent=47 // pred_check
          %p781 = pneg %p274
        $region74: #{tpu_custom_call.1} parent=47 // pred_check_branch
          %783 = sbr.rel (%p781) target = $region76
        $region75: #{tpu_custom_call.1} parent=47 // pred_region
          %s785 = ssub.s32 512, 512
          %786 = vsyncadd %s743, %s785
          %s787 = smul.addr %s36, 4
          %s788 = sadd.s32 %s37, %s787
          %s789 = smul.addr %s788, 128
          %s790 = scalar_lea.hbm %s9, %s789
          %s791 = sshll.u32 %s746, 4
          %s792 = int_to_ptr.vmem [resolvable:$true] %s791
          %797 = dma.vmem_to_hbm [thread:$0]  %s792, 512, %s790, %s743, 128, 128, 8
        $region76: #{tpu_custom_call.1} parent=47 // pred_fallthru
          _
      $region48: #{tpu_custom_call.1} parent=5 // pred_fallthru
        _
      %p798 = scmp.le.s32.totalorder 2, %s27
      // Predicated region
      $region77: #{tpu_custom_call.1} parent=5 // pred_check
        %p799 = pneg %p798
      $region78: #{tpu_custom_call.1} parent=5 // pred_check_branch
        %801 = sbr.rel (%p799) target = $region80
      $region79: #{tpu_custom_call.1} parent=5 // pred_region
        %s802 = ssub.s32 %s27, 2
        // Predicated region
        $region81: #{tpu_custom_call.1} parent=79 // pred_check
          %p803 = pneg %p224
        $region82: #{tpu_custom_call.1} parent=79 // pred_check_branch
          %805 = sbr.rel (%p803) target = $region84
        $region83: #{tpu_custom_call.1} parent=79 // pred_region
          %s806 = sand.u32 %s209, 1
          %s807 = scalar_lea.sflag [#allocation4], %s806
          %s808 = sand.u32 %s209, 1
          %s809 = smul.addr %s808, 32
          %s810 = scalar_lea.vmem [#allocation10], %s809
          %811 = dma.done %s807, 512
        $region84: #{tpu_custom_call.1} parent=79 // pred_fallthru
          _
        // Predicated region
        $region85: #{tpu_custom_call.1} parent=79 // pred_check
          %p812 = pneg %p252
        $region86: #{tpu_custom_call.1} parent=79 // pred_check_branch
          %814 = sbr.rel (%p812) target = $region88
        $region87: #{tpu_custom_call.1} parent=79 // pred_region
          %s815 = sand.u32 %s33, 1
          %s816 = scalar_lea.sflag [#allocation12], %s815
          %s817 = sand.u32 %s237, 1
          %s818 = smul.addr %s817, 32
          %s819 = scalar_lea.vmem [#allocation11], %s818
          %820 = dma.done %s816, 512
        $region88: #{tpu_custom_call.1} parent=79 // pred_fallthru
          _
        // Predicated region
        $region89: #{tpu_custom_call.1} parent=79 // pred_check
          %p821 = pneg %p280
        $region90: #{tpu_custom_call.1} parent=79 // pred_check_branch
          %823 = sbr.rel (%p821) target = $region92
        $region91: #{tpu_custom_call.1} parent=79 // pred_region
          %s824 = sand.u32 %s33, 1
          %s825 = scalar_lea.sflag [#allocation12], %s824
          %s826 = sand.u32 %s265, 1
          %s827 = smul.addr %s826, 32
          %s828 = scalar_lea.vmem [#allocation13], %s827
          %829 = dma.done %s825, 512
        $region92: #{tpu_custom_call.1} parent=79 // pred_fallthru
          _
      $region80: #{tpu_custom_call.1} parent=5 // pred_fallthru
        _
    $region6: #{tpu_custom_call.1} parent=1 // loop_footer
      %s31 = sadd.s32 1, %s27
    $region7: #{tpu_custom_call.1} parent=1 // loop_footer_branch
      %26 = sbr.rel target = $region3
    $region8: #{tpu_custom_call.1} parent=1 // loop_exit
      _
    %830 = vsyncpa [#allocation3], 1
    %s831 = scalar_lea.sflag [#allocation3], 1
    %832 = vsyncpa %s831, 1
    %833 = vsyncpa [#allocation6], 1
    %834 = vsyncpa [#allocation9], 1
    %835 = vsyncpa [#allocation4], 1
    %s836 = scalar_lea.sflag [#allocation4], 1
    %837 = vsyncpa %s836, 1
    %838 = vsyncpa [#allocation12], 1
    %s839 = scalar_lea.sflag [#allocation12], 1
    %840 = vsyncpa %s839, 1

</llo_original>
